<compile_context>
chip_gen: v5e
topology: v5e:2x2
jax: 0.10.0
libtpu: 0.0.40
codegen_flags: <defaults>
</compile_context>

<pallas_src>
import functools

import jax
import jax.numpy as jnp
from jax.experimental import pallas as pl
from jax.experimental.pallas import tpu as pltpu


def _vmem_capacity_bytes():
    try:
        info = pltpu.get_tpu_info()
        for name in ("vmem_capacity_bytes", "vmem_bytes", "vmem_size_bytes"):
            v = getattr(info, name, None)
            if v:
                return int(v)
    except Exception:
        pass
    return 64 * 1024 * 1024  # conservative fallback (v7x physical VMEM)


def _lane_ring_abs_diff(d):
    """|d - roll(d, +-1, axis=1)| per row.  The full-row sum is invariant to
    the rotation direction, so use the single XLU rotate when 128-aligned."""
    w = d.shape[1]
    if w % 128 == 0:
        return jnp.abs(d - pltpu.roll(d, 1, 1))
    return jnp.abs(d - jnp.roll(d, -1, axis=1))


def _tv_partials_kernel(
    den_ref, ref_ref,
    sse_out, tv_out, edge_out,
    sse_acc, tv_acc, edge_acc, carry_row,
    *, tm, acc_rows, h_total, tiles_per_chunk, needs_mask,
):
    c = pl.program_id(0)      # row-chunk (parallel)
    i = pl.program_id(1)      # row-tile within the chunk (sequential carry)

    d = den_ref[...].astype(jnp.float32)
    r = ref_ref[...].astype(jnp.float32)
    w = d.shape[1]
    first_row = d[0:1, :]
    last_row = d[tm - 1:tm, :]

    @pl.when(i == 0)
    def _init():
        sse_acc[...] = jnp.zeros_like(sse_acc)
        tv_acc[...] = jnp.zeros_like(tv_acc)
        edge_acc[...] = jnp.zeros_like(edge_acc)
        # Makes the (unconditional) cross-tile boundary term vanish at i == 0.
        carry_row[...] = first_row

    diff = d - r
    sq = diff * diff
    x_abs = _lane_ring_abs_diff(d)

    if not needs_mask:
        # Full tiles: full axis-0 ring sum, then subtract the one wrong
        # wraparound row |d[tm-1] - d[0]| -- no full-tile iota/select.
        # TODO(synk): switch to pltpu.roll(d, 1, 0) after verifying the
        # sublane-rotate lowering with pl.lower_as_mlir (sum is direction
        # invariant here thanks to the full correction term).
        y_abs = jnp.abs(d - jnp.roll(d, -1, axis=0))
        edge = jnp.abs(carry_row[...] - first_row) - jnp.abs(last_row - first_row)
    else:
        # The global last tile may be partial: mask rows >= valid.
        g0 = (c * tiles_per_chunk + i) * tm
        valid = jnp.minimum(h_total - g0, tm)
        row_idx = jax.lax.broadcasted_iota(jnp.int32, d.shape, 0)
        rmask = row_idx < valid
        pmask = row_idx < (valid - 1)
        sq = jnp.where(rmask, sq, 0.0)
        x_abs = jnp.where(rmask, x_abs, 0.0)
        y_abs = jnp.where(pmask, jnp.abs(d - jnp.roll(d, -1, axis=0)), 0.0)
        edge = jnp.abs(carry_row[...] - first_row)

    # Vreg-shaped accumulators: fold the tile down to (acc_rows, W) with pure
    # VPU adds; the cross-lane reduce to a scalar happens only in the wrapper.
    g = tm // acc_rows
    sse_acc[...] = sse_acc[...] + sq.reshape(g, acc_rows, w).sum(axis=0)
    tv_acc[...] = tv_acc[...] + (x_abs + y_abs).reshape(g, acc_rows, w).sum(axis=0)
    edge_acc[...] = edge_acc[...] + edge

    # Carry this tile's last row to the next step of this chunk.
    carry_row[...] = last_row

    @pl.when(i == pl.num_programs(1) - 1)
    def _finalize():
        sse_out[0] = sse_acc[...]
        tv_out[0] = tv_acc[...]
        edge_out[0] = edge_acc[...]


def _pick_tile_rows(H, W):
    """Largest useful row tile: multiple of 8, working set (2 inputs x 2
    buffers) well inside the generation's VMEM, and >= ~4 tiles so the
    2-chunk parallel axis and the DMA pipeline both have work."""
    if H <= 8:
        return H
    vmem_cap = _vmem_capacity_bytes()
    target_tile_bytes = max(1 << 20, vmem_cap // 8)   # 16 MiB @128 MiB, 8 MiB @64 MiB
    row_bytes = max(1, W) * 4
    vmem_rows = max(8, (target_tile_bytes // row_bytes) // 8 * 8)
    if H >= 32:
        split_rows = max(8, (H // 4) // 8 * 8)
    else:
        split_rows = max(8, pl.cdiv(H, 8) * 8)
    tm = min(vmem_rows, split_rows, pl.cdiv(H, 8) * 8)
    # Prefer an exact divisor (avoids the masked partial-tile path) if one
    # exists without shrinking the tile by more than 2x.
    if H % 8 == 0 and H % tm != 0:
        t = tm
        while t >= 8 and H % t != 0:
            t -= 8
        if t >= 8 and t * 2 >= tm:
            tm = t
    return tm


def tv_denoise_loss(denoised_image, reference_image, tau, tile_rows=None):
    """Scalar loss = MSE(denoised, reference) + tau * R(denoised)."""
    assert denoised_image.shape == reference_image.shape
    assert denoised_image.ndim == 2
    H, W = denoised_image.shape
    # TODO(synk): for extremely wide images add lane (W) tiling as well;
    # current blocks always span the full width.

    TM = int(tile_rows) if tile_rows is not None else _pick_tile_rows(H, W)
    assert TM >= 1
    assert TM == H or TM % 8 == 0, "row tile must be a multiple of 8 (or == H)"

    num_tiles = pl.cdiv(H, TM)
    needs_mask = (H % TM) != 0
    # Two row-chunks: leading "parallel" grid axis so v7x's second TensorCore
    # streams the other half; the single cross-chunk row pair (and the global
    # wraparound pair) is added back in the wrapper.
    num_chunks = 2 if (num_tiles >= 2 and num_tiles % 2 == 0) else 1
    tiles_per_chunk = num_tiles // num_chunks
    acc_rows = 8 if TM % 8 == 0 else TM
    inv_n = 1.0 / float(H * W)

    kernel = functools.partial(
        _tv_partials_kernel,
        tm=TM, acc_rows=acc_rows, h_total=H,
        tiles_per_chunk=tiles_per_chunk, needs_mask=needs_mask,
    )

    itemsize = jnp.dtype(denoised_image.dtype).itemsize
    acc_struct = jax.ShapeDtypeStruct((num_chunks, acc_rows, W), jnp.float32)
    edge_struct = jax.ShapeDtypeStruct((num_chunks, 1, W), jnp.float32)

    # Right-size the VMEM budget from the actual working set.
    tile_bytes = TM * W * itemsize
    scratch_bytes = (2 * acc_rows + 2) * W * 4
    out_bytes = num_chunks * (2 * acc_rows + 1) * W * 4
    vmem_cap = _vmem_capacity_bytes()
    vmem_limit = 4 * tile_bytes + scratch_bytes + 2 * out_bytes + (4 << 20)
    vmem_limit = max(vmem_limit, 16 << 20)
    vmem_limit = int(min(vmem_limit, vmem_cap - (4 << 20)))

    cost = pl.CostEstimate(
        flops=10 * H * W,
        transcendentals=0,
        bytes_accessed=2 * H * W * itemsize + out_bytes,
    )

    acc_spec = pl.BlockSpec((1, acc_rows, W), lambda c, i: (c, 0, 0))
    edge_spec = pl.BlockSpec((1, 1, W), lambda c, i: (c, 0, 0))

    sse_p, tv_p, edge_p = pl.pallas_call(
        kernel,
        out_shape=(acc_struct, acc_struct, edge_struct),
        grid_spec=pltpu.PrefetchScalarGridSpec(
            num_scalar_prefetch=0,
            grid=(num_chunks, tiles_per_chunk),
            in_specs=[
                pl.BlockSpec((TM, W), lambda c, i: (c * tiles_per_chunk + i, 0)),
                pl.BlockSpec((TM, W), lambda c, i: (c * tiles_per_chunk + i, 0)),
            ],
            out_specs=(acc_spec, acc_spec, edge_spec),
            scratch_shapes=[
                pltpu.VMEM((acc_rows, W), jnp.float32),  # squared-error partials
                pltpu.VMEM((acc_rows, W), jnp.float32),  # TV partials
                pltpu.VMEM((1, W), jnp.float32),         # cross-tile edge terms
                pltpu.VMEM((1, W), jnp.float32),         # carried last row
            ],
        ),
        compiler_params=pltpu.CompilerParams(
            dimension_semantics=("parallel", "arbitrary"),
            vmem_limit_bytes=vmem_limit,
        ),
        cost_estimate=cost,
    )(denoised_image, reference_image)

    # Row pairs the kernel cannot see: chunk boundaries + global wraparound.
    d32 = denoised_image.astype(jnp.float32)
    rows_a = [(c + 1) * tiles_per_chunk * TM - 1 for c in range(num_chunks - 1)] + [H - 1]
    rows_b = [(c + 1) * tiles_per_chunk * TM for c in range(num_chunks - 1)] + [0]
    tv_edges = jnp.sum(jnp.abs(d32[jnp.array(rows_a), :] - d32[jnp.array(rows_b), :]))

    sse = jnp.sum(sse_p)
    tv = jnp.sum(tv_p) + jnp.sum(edge_p) + tv_edges
    return sse * inv_n + float(tau) * tv


class TVDenoise:
    """JAX/Pallas mirror of the PyTorch TVDenoise module (forward only)."""
    # TODO(synk): the PyTorch module is optimized via autograd; only the
    # forward loss is implemented here.

    def __init__(self, noisy_image, tau):
        self.tau = float(tau)
        self.reference_image = jnp.asarray(noisy_image, dtype=jnp.float32)
        self.denoised_image = jnp.asarray(noisy_image, dtype=jnp.float32)

    def forward(self, tile_rows=None):
        return tv_denoise_loss(
            self.denoised_image, self.reference_image, self.tau, tile_rows
        )

    def get_denoised_image(self):
        return self.denoised_image


def _reference_loss(denoised, reference, tau):
    # Pure-JAX reference for correctness checking.
    d = denoised.astype(jnp.float32)
    r = reference.astype(jnp.float32)
    mse = jnp.mean((d - r) ** 2)
    x_diff = d - jnp.roll(d, -1, axis=1)
    y_diff = d - jnp.roll(d, -1, axis=0)
    return mse + tau * (jnp.sum(jnp.abs(x_diff)) + jnp.sum(jnp.abs(y_diff)))


if __name__ == "__main__":
    key = jax.random.PRNGKey(0)
    k1, k2, k3, k4, k5 = jax.random.split(key, 5)

    H, W = 64, 128
    clean = jax.random.uniform(k1, (H, W), dtype=jnp.float32)
    noise = 0.1 * jax.random.normal(k2, (H, W), dtype=jnp.float32)
    noisy_image = clean + noise
    tau = 0.05

    model = TVDenoise(noisy_image, tau)
    # In the PyTorch module denoised == reference at init; perturb the
    # denoised image slightly so the MSE term is exercised too.
    model.denoised_image = model.denoised_image + 0.01 * jax.random.normal(
        k3, (H, W), dtype=jnp.float32
    )

    expected = _reference_loss(model.denoised_image, model.reference_image, tau)

    loss_auto = model.forward()                 # auto tiling (4 tiles, 2 chunks)
    loss_single = model.forward(tile_rows=H)    # single full-image tile
    loss_tiled = model.forward(tile_rows=16)    # explicit multi-tile pipeline
    jax.block_until_ready((loss_auto, loss_single, loss_tiled))
    jax.block_until_ready(expected)

    for got in (loss_auto, loss_single, loss_tiled):
        assert jnp.allclose(got, expected, rtol=1e-4, atol=1e-4), (
            float(got), float(expected))

    # Awkward height: exercises the masked partial-tile path and the
    # cross-chunk boundary combine.
    H2 = 60
    d2 = jax.random.uniform(k4, (H2, W), dtype=jnp.float32)
    r2 = d2 + 0.05 * jax.random.normal(k5, (H2, W), dtype=jnp.float32)
    got2 = tv_denoise_loss(d2, r2, tau, tile_rows=16)
    jax.block_until_ready(got2)
    exp2 = _reference_loss(d2, r2, tau)
    assert jnp.allclose(got2, exp2, rtol=1e-4, atol=1e-4), (
        float(got2), float(exp2))

    print("KERNEL_OK")
</pallas_src>

<mosaic_0001>
module attributes {stable_mosaic.version = 11 : i64} {
  func.func @_tv_partials_kernel(%arg0: i32, %arg1: i32, %arg2: memref<16x128xf32, #tpu.memory_space<vmem>>, %arg3: memref<16x128xf32, #tpu.memory_space<vmem>>, %arg4: memref<1x8x128xf32, #tpu.memory_space<vmem>>, %arg5: memref<1x8x128xf32, #tpu.memory_space<vmem>>, %arg6: memref<1x1x128xf32, #tpu.memory_space<vmem>>, %arg7: memref<8x128xf32, #tpu.memory_space<vmem>>, %arg8: memref<8x128xf32, #tpu.memory_space<vmem>>, %arg9: memref<1x128xf32, #tpu.memory_space<vmem>>, %arg10: memref<1x128xf32, #tpu.memory_space<vmem>>) attributes {dimension_semantics = [#tpu.dimension_semantics<parallel>, #tpu.dimension_semantics<arbitrary>], iteration_bounds = array<i64: 2, 2>, scalar_prefetch = 0 : i64, scratch_operands = 4 : i64, tpu.core_type = #tpu.core_type<tc>, window_params = [{transform_indices = @transform_0, window_bounds = array<i64: 16, 128>}, {transform_indices = @transform_1, window_bounds = array<i64: 16, 128>}, {transform_indices = @transform_2, window_bounds = array<i64: 1, 8, 128>}, {transform_indices = @transform_3, window_bounds = array<i64: 1, 8, 128>}, {transform_indices = @transform_4, window_bounds = array<i64: 1, 1, 128>}]} {
    %c0 = arith.constant 0 : index
    %c0_0 = arith.constant 0 : index
    %0 = vector.load %arg2[%c0, %c0_0] : memref<16x128xf32, #tpu.memory_space<vmem>>, vector<16x128xf32>
    %c0_1 = arith.constant 0 : index
    %c0_2 = arith.constant 0 : index
    %1 = vector.load %arg3[%c0_1, %c0_2] : memref<16x128xf32, #tpu.memory_space<vmem>>, vector<16x128xf32>
    %2 = vector.extract_strided_slice %0 {offsets = [0, 0], sizes = [1, 128], strides = [1, 1]} : vector<16x128xf32> to vector<1x128xf32>
    %3 = vector.extract_strided_slice %0 {offsets = [15, 0], sizes = [1, 128], strides = [1, 1]} : vector<16x128xf32> to vector<1x128xf32>
    %c0_i32 = arith.constant 0 : i32
    %4 = arith.cmpi eq, %arg1, %c0_i32 : i32
    %5 = arith.extui %4 : i1 to i32
    %c0_i32_3 = arith.constant 0 : i32
    %6 = arith.cmpi ne, %5, %c0_i32_3 : i32
    scf.if %6 {
      %cst_23 = arith.constant 0.000000e+00 : f32
      %41 = vector.broadcast %cst_23 : f32 to vector<8x128xf32>
      %c0_24 = arith.constant 0 : index
      %c0_25 = arith.constant 0 : index
      %42 = vector.load %arg7[%c0_24, %c0_25] : memref<8x128xf32, #tpu.memory_space<vmem>>, vector<8x128xf32>
      tpu.vector_store %arg7[%c0_24, %c0_25], %41 {strides = array<i32>} : memref<8x128xf32, #tpu.memory_space<vmem>>, vector<8x128xf32>,
      %cst_26 = arith.constant 0.000000e+00 : f32
      %43 = vector.broadcast %cst_26 : f32 to vector<8x128xf32>
      %c0_27 = arith.constant 0 : index
      %c0_28 = arith.constant 0 : index
      %44 = vector.load %arg8[%c0_27, %c0_28] : memref<8x128xf32, #tpu.memory_space<vmem>>, vector<8x128xf32>
      tpu.vector_store %arg8[%c0_27, %c0_28], %43 {strides = array<i32>} : memref<8x128xf32, #tpu.memory_space<vmem>>, vector<8x128xf32>,
      %cst_29 = arith.constant 0.000000e+00 : f32
      %45 = vector.broadcast %cst_29 : f32 to vector<1x128xf32>
      %c0_30 = arith.constant 0 : index
      %c0_31 = arith.constant 0 : index
      %46 = vector.load %arg9[%c0_30, %c0_31] : memref<1x128xf32, #tpu.memory_space<vmem>>, vector<1x128xf32>
      tpu.vector_store %arg9[%c0_30, %c0_31], %45 {strides = array<i32>} : memref<1x128xf32, #tpu.memory_space<vmem>>, vector<1x128xf32>,
      %c0_32 = arith.constant 0 : index
      %c0_33 = arith.constant 0 : index
      %47 = vector.load %arg10[%c0_32, %c0_33] : memref<1x128xf32, #tpu.memory_space<vmem>>, vector<1x128xf32>
      tpu.vector_store %arg10[%c0_32, %c0_33], %2 {strides = array<i32>} : memref<1x128xf32, #tpu.memory_space<vmem>>, vector<1x128xf32>,
    } else {
    }
    %7 = arith.subf %0, %1 : vector<16x128xf32>
    %8 = arith.mulf %7, %7 : vector<16x128xf32>
    %c1_i32 = arith.constant 1 : i32
    %9 = tpu.dynamic_rotate %0 by %c1_i32 dim 1 : vector<16x128xf32>, i32 -> vector<16x128xf32>
    %10 = arith.subf %0, %9 : vector<16x128xf32>
    %11 = math.absf %10 : vector<16x128xf32>
    %12 = vector.extract_strided_slice %0 {offsets = [1, 0], sizes = [15, 128], strides = [1, 1]} : vector<16x128xf32> to vector<15x128xf32>
    %13 = vector.extract_strided_slice %0 {offsets = [0, 0], sizes = [1, 128], strides = [1, 1]} : vector<16x128xf32> to vector<1x128xf32>
    %14 = tpu.concatenate %12, %13 in 0 : vector<15x128xf32>, vector<1x128xf32> -> vector<16x128xf32>
    %15 = arith.subf %0, %14 : vector<16x128xf32>
    %16 = math.absf %15 : vector<16x128xf32>
    %c0_4 = arith.constant 0 : index
    %c0_5 = arith.constant 0 : index
    %17 = vector.load %arg10[%c0_4, %c0_5] : memref<1x128xf32, #tpu.memory_space<vmem>>, vector<1x128xf32>
    %18 = arith.subf %17, %2 : vector<1x128xf32>
    %19 = math.absf %18 : vector<1x128xf32>
    %20 = arith.subf %3, %2 : vector<1x128xf32>
    %21 = math.absf %20 : vector<1x128xf32>
    %22 = arith.subf %19, %21 : vector<1x128xf32>
    %c0_6 = arith.constant 0 : index
    %c0_7 = arith.constant 0 : index
    %23 = vector.load %arg7[%c0_6, %c0_7] : memref<8x128xf32, #tpu.memory_space<vmem>>, vector<8x128xf32>
    %24 = vector.shape_cast %8 : vector<16x128xf32> to vector<2x8x128xf32>
    %cst = arith.constant dense<0.000000e+00> : vector<8x128xf32>
    %25 = vector.multi_reduction <add>, %24, %cst [0] : vector<2x8x128xf32> to vector<8x128xf32>
    %26 = arith.addf %23, %25 : vector<8x128xf32>
    %c0_8 = arith.constant 0 : index
    %c0_9 = arith.constant 0 : index
    %27 = vector.load %arg7[%c0_8, %c0_9] : memref<8x128xf32, #tpu.memory_space<vmem>>, vector<8x128xf32>
    tpu.vector_store %arg7[%c0_8, %c0_9], %26 {strides = array<i32>} : memref<8x128xf32, #tpu.memory_space<vmem>>, vector<8x128xf32>,
    %c0_10 = arith.constant 0 : index
    %c0_11 = arith.constant 0 : index
    %28 = vector.load %arg8[%c0_10, %c0_11] : memref<8x128xf32, #tpu.memory_space<vmem>>, vector<8x128xf32>
    %29 = arith.addf %11, %16 : vector<16x128xf32>
    %30 = vector.shape_cast %29 : vector<16x128xf32> to vector<2x8x128xf32>
    %cst_12 = arith.constant dense<0.000000e+00> : vector<8x128xf32>
    %31 = vector.multi_reduction <add>, %30, %cst_12 [0] : vector<2x8x128xf32> to vector<8x128xf32>
    %32 = arith.addf %28, %31 : vector<8x128xf32>
    %c0_13 = arith.constant 0 : index
    %c0_14 = arith.constant 0 : index
    %33 = vector.load %arg8[%c0_13, %c0_14] : memref<8x128xf32, #tpu.memory_space<vmem>>, vector<8x128xf32>
    tpu.vector_store %arg8[%c0_13, %c0_14], %32 {strides = array<i32>} : memref<8x128xf32, #tpu.memory_space<vmem>>, vector<8x128xf32>,
    %c0_15 = arith.constant 0 : index
    %c0_16 = arith.constant 0 : index
    %34 = vector.load %arg9[%c0_15, %c0_16] : memref<1x128xf32, #tpu.memory_space<vmem>>, vector<1x128xf32>
    %35 = arith.addf %34, %22 : vector<1x128xf32>
    %c0_17 = arith.constant 0 : index
    %c0_18 = arith.constant 0 : index
    %36 = vector.load %arg9[%c0_17, %c0_18] : memref<1x128xf32, #tpu.memory_space<vmem>>, vector<1x128xf32>
    tpu.vector_store %arg9[%c0_17, %c0_18], %35 {strides = array<i32>} : memref<1x128xf32, #tpu.memory_space<vmem>>, vector<1x128xf32>,
    %c0_19 = arith.constant 0 : index
    %c0_20 = arith.constant 0 : index
    %37 = vector.load %arg10[%c0_19, %c0_20] : memref<1x128xf32, #tpu.memory_space<vmem>>, vector<1x128xf32>
    tpu.vector_store %arg10[%c0_19, %c0_20], %3 {strides = array<i32>} : memref<1x128xf32, #tpu.memory_space<vmem>>, vector<1x128xf32>,
    %c1_i32_21 = arith.constant 1 : i32
    %38 = arith.cmpi eq, %arg1, %c1_i32_21 : i32
    %39 = arith.extui %38 : i1 to i32
    %c0_i32_22 = arith.constant 0 : i32
    %40 = arith.cmpi ne, %39, %c0_i32_22 : i32
    scf.if %40 {
      %c0_23 = arith.constant 0 : index
      %c0_24 = arith.constant 0 : index
      %41 = vector.load %arg7[%c0_23, %c0_24] : memref<8x128xf32, #tpu.memory_space<vmem>>, vector<8x128xf32>
      %c0_25 = arith.constant 0 : index
      %c0_26 = arith.constant 0 : index
      %c0_27 = arith.constant 0 : index
      %42 = vector.load %arg4[%c0_25, %c0_26, %c0_27] : memref<1x8x128xf32, #tpu.memory_space<vmem>>, vector<1x8x128xf32>
      %43 = vector.shape_cast %42 : vector<1x8x128xf32> to vector<8x128xf32>
      %44 = vector.shape_cast %41 : vector<8x128xf32> to vector<1x8x128xf32>
      tpu.vector_store %arg4[%c0_25, %c0_26, %c0_27], %44 {strides = array<i32>} : memref<1x8x128xf32, #tpu.memory_space<vmem>>, vector<1x8x128xf32>,
      %c0_28 = arith.constant 0 : index
      %c0_29 = arith.constant 0 : index
      %45 = vector.load %arg8[%c0_28, %c0_29] : memref<8x128xf32, #tpu.memory_space<vmem>>, vector<8x128xf32>
      %c0_30 = arith.constant 0 : index
      %c0_31 = arith.constant 0 : index
      %c0_32 = arith.constant 0 : index
      %46 = vector.load %arg5[%c0_30, %c0_31, %c0_32] : memref<1x8x128xf32, #tpu.memory_space<vmem>>, vector<1x8x128xf32>
      %47 = vector.shape_cast %46 : vector<1x8x128xf32> to vector<8x128xf32>
      %48 = vector.shape_cast %45 : vector<8x128xf32> to vector<1x8x128xf32>
      tpu.vector_store %arg5[%c0_30, %c0_31, %c0_32], %48 {strides = array<i32>} : memref<1x8x128xf32, #tpu.memory_space<vmem>>, vector<1x8x128xf32>,
      %c0_33 = arith.constant 0 : index
      %c0_34 = arith.constant 0 : index
      %49 = vector.load %arg9[%c0_33, %c0_34] : memref<1x128xf32, #tpu.memory_space<vmem>>, vector<1x128xf32>
      %c0_35 = arith.constant 0 : index
      %c0_36 = arith.constant 0 : index
      %c0_37 = arith.constant 0 : index
      %50 = vector.load %arg6[%c0_35, %c0_36, %c0_37] : memref<1x1x128xf32, #tpu.memory_space<vmem>>, vector<1x1x128xf32>
      %51 = vector.shape_cast %50 : vector<1x1x128xf32> to vector<1x128xf32>
      %52 = vector.shape_cast %49 : vector<1x128xf32> to vector<1x1x128xf32>
      tpu.vector_store %arg6[%c0_35, %c0_36, %c0_37], %52 {strides = array<i32>} : memref<1x1x128xf32, #tpu.memory_space<vmem>>, vector<1x1x128xf32>,
    } else {
    }
    return
  }
  func.func @transform_0(%arg0: i32, %arg1: i32) -> (i32, i32) {
    %c2_i32 = arith.constant 2 : i32
    %0 = arith.muli %arg0, %c2_i32 : i32
    %1 = arith.addi %0, %arg1 : i32
    %c0_i32 = arith.constant 0 : i32
    %c0_i32_0 = arith.constant 0 : i32
    return %1, %c0_i32 : i32, i32
  }
  func.func @transform_1(%arg0: i32, %arg1: i32) -> (i32, i32) {
    %c2_i32 = arith.constant 2 : i32
    %0 = arith.muli %arg0, %c2_i32 : i32
    %1 = arith.addi %0, %arg1 : i32
    %c0_i32 = arith.constant 0 : i32
    %c0_i32_0 = arith.constant 0 : i32
    return %1, %c0_i32 : i32, i32
  }
  func.func @transform_2(%arg0: i32, %arg1: i32) -> (i32, i32, i32) {
    %c0_i32 = arith.constant 0 : i32
    %c0_i32_0 = arith.constant 0 : i32
    %c0_i32_1 = arith.constant 0 : i32
    return %arg0, %c0_i32, %c0_i32_0 : i32, i32, i32
  }
  func.func @transform_3(%arg0: i32, %arg1: i32) -> (i32, i32, i32) {
    %c0_i32 = arith.constant 0 : i32
    %c0_i32_0 = arith.constant 0 : i32
    %c0_i32_1 = arith.constant 0 : i32
    return %arg0, %c0_i32, %c0_i32_0 : i32, i32, i32
  }
  func.func @transform_4(%arg0: i32, %arg1: i32) -> (i32, i32, i32) {
    %c0_i32 = arith.constant 0 : i32
    %c0_i32_0 = arith.constant 0 : i32
    %c0_i32_1 = arith.constant 0 : i32
    return %arg0, %c0_i32, %c0_i32_0 : i32, i32, i32
  }
}

</mosaic_0001>

<llo_original>
// kernel: tpu_custom_call.1
$region0: #{tpu_custom_call.1}
  #allocation0 [shape = 'u32[]', space=smem, size = 0x4, offset = 0x4, fixed_abs, tag = 'smem constant byte address 0x4 - core index']
  #allocation1 [shape = 'u32[72,128]{1,0:T(1,128)}', space=vmem, size = 0x9000, scoped, tag = 'internal scratch']
  #allocation2 [shape = 'f32[8,128]{1,0:T(8,128)}', space=vmem, size = 0x1000, scoped, tag = 'scratch operand']
  #allocation3 [shape = 'f32[8,128]{1,0:T(8,128)}', space=vmem, size = 0x1000, scoped, tag = 'scratch operand']
  #allocation4 [shape = 'f32[1,128]{1,0:T(1,128)}', space=vmem, size = 0x200, scoped, tag = 'scratch operand']
  #allocation5 [shape = 'f32[1,128]{1,0:T(1,128)}', space=vmem, size = 0x200, scoped, tag = 'scratch operand']
  %s0 = inlined_call_operand.hbm [shape: f32[64,128], index: 0, kind: input, shape index: {}]
  %s1 = inlined_call_operand.hbm [shape: f32[64,128], index: 1, kind: input, shape index: {}]
  %s2 = inlined_call_operand.hbm [shape: f32[2,8,128], index: 2, kind: output, shape index: {0}]
  %s3 = inlined_call_operand.hbm [shape: f32[2,8,128], index: 3, kind: output, shape index: {1}]
  %s4 = inlined_call_operand.hbm [shape: f32[2,1,128], index: 4, kind: output, shape index: {2}]
  %5 = xla_tuple %s2, %s3, %s4
  %s6 = sld [smem:[#allocation0]]
  $region73: #{tpu_custom_call.1} parent=0
    _
  %s8 = ssub.s32 1, %s6
  %s9 = scalar_select 0, %s8, %s6
  $region1: #{tpu_custom_call.1} parent=0
    #allocation6 [shape = 'u8[16384]{0}', space=vmem, size = 0x4000, scoped, tag = 'input window, operand 0']
    #allocation7 [shape = 's32[2]{0}', space=sflag, size = 0x8, scoped, tag = 'scoped memory for tpu_custom_call.1']
    #allocation8 [shape = 's32[2]{0}', space=sflag, size = 0x8, scoped, tag = 'scoped memory for tpu_custom_call.1']
    #allocation9 [shape = 'u8[16384]{0}', space=vmem, size = 0x4000, scoped, tag = 'input window, operand 1']
    #allocation10 [shape = 's32[2]{0}', space=sflag, size = 0x8, scoped, tag = 'scoped memory for tpu_custom_call.1']
    #allocation11 [shape = 'u8[8192]{0}', space=vmem, size = 0x2000, scoped, tag = 'output window, operand 0']
    #allocation12 [shape = 'u8[8192]{0}', space=vmem, size = 0x2000, scoped, tag = 'output window, operand 1']
    #allocation13 [shape = 's32[2]{0}', space=sflag, size = 0x8, scoped, tag = 'scoped memory for tpu_custom_call.1']
    #allocation14 [shape = 'u8[1024]{0}', space=vmem, size = 0x400, scoped, tag = 'output window, operand 2']
    %10 = vsyncpa [#allocation7], 0
    %s11 = scalar_lea.sflag [#allocation7], 1
    %12 = vsyncpa %s11, 0
    %13 = vsyncpa [#allocation10], 0
    %s14 = scalar_lea.sflag [#allocation10], 1
    %15 = vsyncpa %s14, 0
    %16 = vsyncpa [#allocation8], 0
    %s17 = scalar_lea.sflag [#allocation8], 1
    %18 = vsyncpa %s17, 0
    %19 = vsyncpa [#allocation13], 0
    %s20 = scalar_lea.sflag [#allocation13], 1
    %21 = vsyncpa %s20, 0
    loop: start=0, step=1, limit=6
    $region2: #{tpu_custom_call.1} parent=1 // loop_pre_header
      _
    $region3: #{tpu_custom_call.1} parent=1 // loop_header
      %s23 = sphi 0, %s27
      %p24 = scmp.ge.s32.totalorder %s23, 6
      %s30 = sphi 0, %s42
      %s31 = sphi 0, %s38
      %s32 = sphi 0, %s30
      %s33 = sphi 0, %s31
      %s34 = sphi 0, %s32
      %s35 = sphi 0, %s33
      %s49 = sphi 0, %s51
      %s52 = sphi 0, %s49
      %s53 = sphi 0, %s52
      %s69 = sphi 0, %s53
      %s79 = sphi 0, %s81
      %s82 = sphi 0, %s79
      %s83 = sphi 0, %s82
      %s99 = sphi 0, %s83
      %s105 = sphi 0, %s107
      %s108 = sphi 0, %s105
      %s109 = sphi 0, %s108
      %s125 = sphi 0, %s109
      %s131 = sphi 0, %s133
      %s134 = sphi 0, %s131
      %s135 = sphi 0, %s134
      %s151 = sphi 0, %s135
      %s157 = sphi 0, %s159
      %s160 = sphi 0, %s157
      %s161 = sphi 0, %s160
      %s177 = sphi 0, %s161
    $region4: #{tpu_custom_call.1} parent=1 // loop_header_branch
      %26 = sbr.rel (%p24) target = $region8
    $region5: #{tpu_custom_call.1} parent=1 // loop_body
      %s28 = ssub.s32 %s23, 1
      %s29 = ssub.s32 %s23, 2
      %s36 = sadd.s32 1, %s31
      %p37 = scmp.ge.s32.totalorder %s36, 2
      %s38 = scalar_select %p37, 0, %s36
      %s39 = sadd.s32 1, %s30
      %s40 = scalar_select %p37, %s39, %s30
      %p41 = scmp.ge.s32.totalorder %s40, 2
      %s42 = scalar_select %p41, 0, %s40
      %s43 = smul.u32 %s30, 2
      %s44 = sadd.s32 %s43, %s31
      %s45 = smul.u32 %s42, 2
      %s46 = sadd.s32 %s45, %s38
      %s47 = ssub.s32 %s44, %s46
      %p48 = scmp.eq.s32.totalorder %s47, 0
      %s50 = sadd.s32 %s49, 1
      %s51 = scalar_select %p48, %s49, %s50
      %p54 = pneg %p48
      %p55 = scmp.eq.s32.totalorder %s23, 3
      %p56 = por %p54, %p55
      %p57 = scmp.ne.s32.totalorder %s49, %s52
      %p58 = scmp.eq.s32.totalorder %s23, 0
      %p59 = por %p57, %p58
      %p60 = scmp.ne.s32.totalorder %s49, %s52
      %p61 = scmp.eq.s32.totalorder %s28, 3
      %p62 = por %p60, %p61
      %p63 = scmp.ne.s32.totalorder %s52, %s53
      %p64 = scmp.eq.s32.totalorder %s28, 0
      %p65 = por %p63, %p64
      %p66 = scmp.ne.s32.totalorder %s52, %s53
      %p67 = scmp.eq.s32.totalorder %s29, 3
      %p68 = por %p66, %p67
      %p70 = scmp.ne.s32.totalorder %s53, %s69
      %p71 = scmp.eq.s32.totalorder %s29, 0
      %p72 = por %p70, %p71
      %s73 = smul.u32 %s30, 2
      %s74 = sadd.s32 %s73, %s31
      %s75 = smul.u32 %s42, 2
      %s76 = sadd.s32 %s75, %s38
      %s77 = ssub.s32 %s74, %s76
      %p78 = scmp.eq.s32.totalorder %s77, 0
      %s80 = sadd.s32 %s79, 1
      %s81 = scalar_select %p78, %s79, %s80
      %p84 = pneg %p78
      %p85 = scmp.eq.s32.totalorder %s23, 3
      %p86 = por %p84, %p85
      %p87 = scmp.ne.s32.totalorder %s79, %s82
      %p88 = scmp.eq.s32.totalorder %s23, 0
      %p89 = por %p87, %p88
      %p90 = scmp.ne.s32.totalorder %s79, %s82
      %p91 = scmp.eq.s32.totalorder %s28, 3
      %p92 = por %p90, %p91
      %p93 = scmp.ne.s32.totalorder %s82, %s83
      %p94 = scmp.eq.s32.totalorder %s28, 0
      %p95 = por %p93, %p94
      %p96 = scmp.ne.s32.totalorder %s82, %s83
      %p97 = scmp.eq.s32.totalorder %s29, 3
      %p98 = por %p96, %p97
      %p100 = scmp.ne.s32.totalorder %s83, %s99
      %p101 = scmp.eq.s32.totalorder %s29, 0
      %p102 = por %p100, %p101
      %s103 = ssub.s32 %s30, %s42
      %p104 = scmp.eq.s32.totalorder %s103, 0
      %s106 = sadd.s32 %s105, 1
      %s107 = scalar_select %p104, %s105, %s106
      %p110 = pneg %p104
      %p111 = scmp.eq.s32.totalorder %s23, 3
      %p112 = por %p110, %p111
      %p113 = scmp.ne.s32.totalorder %s105, %s108
      %p114 = scmp.eq.s32.totalorder %s23, 0
      %p115 = por %p113, %p114
      %p116 = scmp.ne.s32.totalorder %s105, %s108
      %p117 = scmp.eq.s32.totalorder %s28, 3
      %p118 = por %p116, %p117
      %p119 = scmp.ne.s32.totalorder %s108, %s109
      %p120 = scmp.eq.s32.totalorder %s28, 0
      %p121 = por %p119, %p120
      %p122 = scmp.ne.s32.totalorder %s108, %s109
      %p123 = scmp.eq.s32.totalorder %s29, 3
      %p124 = por %p122, %p123
      %p126 = scmp.ne.s32.totalorder %s109, %s125
      %p127 = scmp.eq.s32.totalorder %s29, 0
      %p128 = por %p126, %p127
      %s129 = ssub.s32 %s30, %s42
      %p130 = scmp.eq.s32.totalorder %s129, 0
      %s132 = sadd.s32 %s131, 1
      %s133 = scalar_select %p130, %s131, %s132
      %p136 = pneg %p130
      %p137 = scmp.eq.s32.totalorder %s23, 3
      %p138 = por %p136, %p137
      %p139 = scmp.ne.s32.totalorder %s131, %s134
      %p140 = scmp.eq.s32.totalorder %s23, 0
      %p141 = por %p139, %p140
      %p142 = scmp.ne.s32.totalorder %s131, %s134
      %p143 = scmp.eq.s32.totalorder %s28, 3
      %p144 = por %p142, %p143
      %p145 = scmp.ne.s32.totalorder %s134, %s135
      %p146 = scmp.eq.s32.totalorder %s28, 0
      %p147 = por %p145, %p146
      %p148 = scmp.ne.s32.totalorder %s134, %s135
      %p149 = scmp.eq.s32.totalorder %s29, 3
      %p150 = por %p148, %p149
      %p152 = scmp.ne.s32.totalorder %s135, %s151
      %p153 = scmp.eq.s32.totalorder %s29, 0
      %p154 = por %p152, %p153
      %s155 = ssub.s32 %s30, %s42
      %p156 = scmp.eq.s32.totalorder %s155, 0
      %s158 = sadd.s32 %s157, 1
      %s159 = scalar_select %p156, %s157, %s158
      %p162 = pneg %p156
      %p163 = scmp.eq.s32.totalorder %s23, 3
      %p164 = por %p162, %p163
      %p165 = scmp.ne.s32.totalorder %s157, %s160
      %p166 = scmp.eq.s32.totalorder %s23, 0
      %p167 = por %p165, %p166
      %p168 = scmp.ne.s32.totalorder %s157, %s160
      %p169 = scmp.eq.s32.totalorder %s28, 3
      %p170 = por %p168, %p169
      %p171 = scmp.ne.s32.totalorder %s160, %s161
      %p172 = scmp.eq.s32.totalorder %s28, 0
      %p173 = por %p171, %p172
      %p174 = scmp.ne.s32.totalorder %s160, %s161
      %p175 = scmp.eq.s32.totalorder %s29, 3
      %p176 = por %p174, %p175
      %p178 = scmp.ne.s32.totalorder %s161, %s177
      %p179 = scmp.eq.s32.totalorder %s29, 0
      %p180 = por %p178, %p179
      %p181 = scmp.le.s32.totalorder 1, %s23
      %p182 = scmp.lt.s32.totalorder %s23, 5
      %p183 = pnand %p181, %p182
      %p184 = pneg %p183
      // Predicated region
      $region9: #{tpu_custom_call.1} parent=5 // pred_check
        _
      $region10: #{tpu_custom_call.1} parent=5 // pred_check_branch
        %186 = sbr.rel (%p183) target = $region12
      $region11: #{tpu_custom_call.1} parent=5 // pred_region
        %s187 = ssub.s32 %s23, 1
      $region12: #{tpu_custom_call.1} parent=5 // pred_fallthru
        _
      %p188 = scmp.lt.s32.totalorder %s23, 4
      // Predicated region
      $region13: #{tpu_custom_call.1} parent=5 // pred_check
        %p189 = pneg %p188
      $region14: #{tpu_custom_call.1} parent=5 // pred_check_branch
        %191 = sbr.rel (%p189) target = $region16
      $region15: #{tpu_custom_call.1} parent=5 // pred_region
        // Predicated region
        $region17: #{tpu_custom_call.1} parent=15 // pred_check
          %p192 = pneg %p59
        $region18: #{tpu_custom_call.1} parent=15 // pred_check_branch
          %194 = sbr.rel (%p192) target = $region20
        $region19: #{tpu_custom_call.1} parent=15 // pred_region
          %s195 = sand.u32 %s49, 1
          %s196 = scalar_lea.sflag [#allocation7], %s195
          %s197 = sand.u32 %s49, 1
          %s198 = smul.addr %s197, 16
          %s199 = scalar_lea.vmem [#allocation6], %s198
          %s200 = smul.u32 %s30, 2
          %s201 = sadd.s32 %s200, %s31
          %s202 = smul.u32 2, %s201
          %204 = vsyncadd %s196, 0
          %s205 = smul.addr %s202, 8
          %s206 = scalar_lea.hbm %s0, %s205
          %s207 = sshll.u32 %s206, 4
          %s208 = int_to_ptr.hbm [resolvable:$true] %s207
          %s209 = sshll.u32 %s199, 4
          %s210 = int_to_ptr.vmem [resolvable:$true] %s209
          %215 = dma.hbm_to_vmem [thread:$0]  %s208, 256, %s210, %s196, 128, 128, 8
        $region20: #{tpu_custom_call.1} parent=15 // pred_fallthru
          _
        // Predicated region
        $region21: #{tpu_custom_call.1} parent=15 // pred_check
          %p216 = pneg %p89
        $region22: #{tpu_custom_call.1} parent=15 // pred_check_branch
          %218 = sbr.rel (%p216) target = $region24
        $region23: #{tpu_custom_call.1} parent=15 // pred_region
          %s219 = sand.u32 %s79, 1
          %s220 = scalar_lea.sflag [#allocation10], %s219
          %s221 = sand.u32 %s79, 1
          %s222 = smul.addr %s221, 16
          %s223 = scalar_lea.vmem [#allocation9], %s222
          %s224 = smul.u32 %s30, 2
          %s225 = sadd.s32 %s224, %s31
          %s226 = smul.u32 2, %s225
          %228 = vsyncadd %s220, 0
          %s229 = smul.addr %s226, 8
          %s230 = scalar_lea.hbm %s1, %s229
          %s231 = sshll.u32 %s230, 4
          %s232 = int_to_ptr.hbm [resolvable:$true] %s231
          %s233 = sshll.u32 %s223, 4
          %s234 = int_to_ptr.vmem [resolvable:$true] %s233
          %239 = dma.hbm_to_vmem [thread:$0]  %s232, 256, %s234, %s220, 128, 128, 8
        $region24: #{tpu_custom_call.1} parent=15 // pred_fallthru
          _
      $region16: #{tpu_custom_call.1} parent=5 // pred_fallthru
        _
      %p240 = scmp.le.s32.totalorder 1, %s23
      %p241 = scmp.lt.s32.totalorder %s23, 5
      %p242 = pnand %p240, %p241
      %p243 = pneg %p242
      // Predicated region
      $region25: #{tpu_custom_call.1} parent=5 // pred_check
        _
      $region26: #{tpu_custom_call.1} parent=5 // pred_check_branch
        %245 = sbr.rel (%p242) target = $region28
      $region27: #{tpu_custom_call.1} parent=5 // pred_region
        %s246 = ssub.s32 %s23, 1
        %s247 = sand.u32 %s52, 1
        %s248 = scalar_lea.sflag [#allocation7], %s247
        %s249 = sand.u32 %s52, 1
        %s250 = smul.addr %s249, 16
        %s251 = scalar_lea.vmem [#allocation6], %s250
        // Predicated region
        $region29: #{tpu_custom_call.1} parent=27 // pred_check
          %p252 = pneg %p65
        $region30: #{tpu_custom_call.1} parent=27 // pred_check_branch
          %254 = sbr.rel (%p252) target = $region32
        $region31: #{tpu_custom_call.1} parent=27 // pred_region
          %256 = dma.done %s248, 256
        $region32: #{tpu_custom_call.1} parent=27 // pred_fallthru
          _
        %s257 = sand.u32 %s82, 1
        %s258 = scalar_lea.sflag [#allocation10], %s257
        %s259 = sand.u32 %s82, 1
        %s260 = smul.addr %s259, 16
        %s261 = scalar_lea.vmem [#allocation9], %s260
        // Predicated region
        $region33: #{tpu_custom_call.1} parent=27 // pred_check
          %p262 = pneg %p95
        $region34: #{tpu_custom_call.1} parent=27 // pred_check_branch
          %264 = sbr.rel (%p262) target = $region36
        $region35: #{tpu_custom_call.1} parent=27 // pred_region
          %266 = dma.done %s258, 256
        $region36: #{tpu_custom_call.1} parent=27 // pred_fallthru
          _
        %s267 = sand.u32 %s52, 1
        %s268 = scalar_lea.sflag [#allocation7], %s267
        %s269 = sand.u32 %s52, 1
        %s270 = smul.addr %s269, 16
        %s271 = scalar_lea.vmem [#allocation6], %s270
        %p272 = pneg %p65
        %p273 = pneg %p62
        %s274 = sand.u32 %s82, 1
        %s275 = scalar_lea.sflag [#allocation10], %s274
        %s276 = sand.u32 %s82, 1
        %s277 = smul.addr %s276, 16
        %s278 = scalar_lea.vmem [#allocation9], %s277
        %p279 = pneg %p95
        %p280 = pneg %p92
        %p281 = pneg %p121
        %p282 = pneg %p118
        %s283 = sand.u32 %s108, 1
        %s284 = scalar_lea.sflag [#allocation8], %s283
        %s285 = sand.u32 %s108, 1
        %s286 = smul.addr %s285, 8
        %s287 = scalar_lea.vmem [#allocation11], %s286
        %p288 = pneg %p147
        %p289 = pneg %p144
        %s290 = sand.u32 %s28, 1
        %s291 = scalar_lea.sflag [#allocation13], %s290
        %s292 = sand.u32 %s134, 1
        %s293 = smul.addr %s292, 8
        %s294 = scalar_lea.vmem [#allocation12], %s293
        %p295 = pneg %p173
        %p296 = pneg %p170
        %s297 = sand.u32 %s28, 1
        %s298 = scalar_lea.sflag [#allocation13], %s297
        %s299 = sand.u32 %s160, 1
        %s300 = scalar_lea.vmem [#allocation14], %s299
        %s301 = smul.u32 %s32, 2
        %s302 = sadd.s32 %s301, %s33
        %s303 = smul.u32 2, %s302
        %s304 = smul.u32 %s32, 2
        %s305 = sadd.s32 %s304, %s33
        %s306 = smul.u32 2, %s305
        %v307 = vld [vmem:[%s251] sm:$0xff]
        %v308 = vld [vmem:[%s251 + $0x8] sm:$0xff]
        %v309 = vld [vmem:[%s261] sm:$0xff]
        %v310 = vld [vmem:[%s261 + $0x8] sm:$0xff]
        %p311 = scmp.eq.s32.totalorder %s33, 0
        // Predicated region
        $region37: #{tpu_custom_call.1} parent=27 // pred_check
          %p312 = pneg %p311
        $region38: #{tpu_custom_call.1} parent=27 // pred_check_branch
          %314 = sbr.rel (%p312) target = $region40
        $region39: #{tpu_custom_call.1} parent=27 // pred_region
          %315 = vst [vmem:[#allocation2] sm:$0xff] 0.0
          %316 = vst [vmem:[#allocation3] sm:$0xff] 0.0
          %317 = vst [vmem:[#allocation4] sm:$0x1] 0.0
          %318 = vst [vmem:[#allocation5] sm:$0x1] %v307
        $region40: #{tpu_custom_call.1} parent=27 // pred_fallthru
          _
        %v319 = vsub.f32 %v307, %v309
        %v320 = vsub.f32 %v308, %v310
        %v321 = vmul.f32 %v319, %v319
        %v322 = vmul.f32 %v320, %v320
        %323 = vrot.lane.b32.xlu0 %v307, 1
        %v324 = vpop.permute.xlu0 %323
        %325 = vrot.lane.b32.xlu0 %v308, 1
        %v326 = vpop.permute.xlu0 %325
        %v327 = vsub.f32 %v307, %v324
        %v328 = vsub.f32 %v308, %v326
        %v329 = vand.u32 2147483647, %v327
        %v330 = vand.u32 2147483647, %v328
        %vm333 = vcmask 1046528
        %v334 = vrot.slane %v307, 1
        %v335 = vrot.slane %v308, 1
        %v336 = vsel %vm333, %v334, %v335
        %v340 = vsel %vm333, %v335, %v334
        %v341 = vsub.f32 %v307, %v336
        %v342 = vsub.f32 %v308, %v340
        %v343 = vand.u32 2147483647, %v341
        %v344 = vand.u32 2147483647, %v342
        %v345 = vld [vmem:[#allocation5] sm:$0x1]
        %v346 = vsub.f32 %v345, %v307
        %v347 = vand.u32 2147483647, %v346
        %v348 = vsub.f32 %v308, %v334
        %v349 = vand.u32 2147483647, %v348
        %351 = vst [vmem:[#allocation1] sm:$0xff] %v349
        %s352 = scalar_lea.vmem [#allocation1], 7
        %v353 = vld [vmem:[%s352] ss:$9 sm:$0xff]
        %v355 = vsub.f32 %v347, %v353
        %v356 = vld [vmem:[#allocation2] sm:$0xff]
        %v357 = vadd.f32 %v321, %v322
        %v358 = vadd.f32 %v356, %v357
        %359 = vst [vmem:[#allocation2] sm:$0xff] %v358
        %v360 = vld [vmem:[#allocation3] sm:$0xff]
        %v361 = vadd.f32 %v329, %v343
        %v362 = vadd.f32 %v330, %v344
        %v363 = vadd.f32 %v361, %v362
        %v364 = vadd.f32 %v360, %v363
        %365 = vst [vmem:[#allocation3] sm:$0xff] %v364
        %v366 = vld [vmem:[#allocation4] sm:$0x1]
        %v367 = vadd.f32 %v366, %v355
        %368 = vst [vmem:[#allocation4] sm:$0x1] %v367
        %369 = vst [vmem:[#allocation5 - $0x7] sm:$0x80] %v308
        %p370 = scmp.eq.s32.totalorder %s33, 1
        // Predicated region
        $region41: #{tpu_custom_call.1} parent=27 // pred_check
          %p371 = pneg %p370
        $region42: #{tpu_custom_call.1} parent=27 // pred_check_branch
          %373 = sbr.rel (%p371) target = $region44
        $region43: #{tpu_custom_call.1} parent=27 // pred_region
          %v374 = vld [vmem:[#allocation2] sm:$0xff]
          %375 = vst [vmem:[%s287] sm:$0xff] %v374
          %v376 = vld [vmem:[#allocation3] sm:$0xff]
          %377 = vst [vmem:[%s294] sm:$0xff] %v376
          %v378 = vld [vmem:[#allocation4] sm:$0x1]
          %379 = vst [vmem:[%s300] sm:$0x1] %v378
        $region44: #{tpu_custom_call.1} parent=27 // pred_fallthru
          _
        %s380 = sand.u32 %s108, 1
        %s381 = scalar_lea.sflag [#allocation8], %s380
        %s382 = sand.u32 %s108, 1
        %s383 = smul.addr %s382, 8
        %s384 = scalar_lea.vmem [#allocation11], %s383
        %s385 = sand.u32 %s28, 1
        %s386 = scalar_lea.sflag [#allocation13], %s385
        %s387 = sand.u32 %s134, 1
        %s388 = smul.addr %s387, 8
        %s389 = scalar_lea.vmem [#allocation12], %s388
        %s390 = sand.u32 %s28, 1
        %s391 = scalar_lea.sflag [#allocation13], %s390
        %s392 = sand.u32 %s160, 1
        %s393 = scalar_lea.vmem [#allocation14], %s392
        // Predicated region
        $region45: #{tpu_custom_call.1} parent=27 // pred_check
          %p394 = pneg %p118
        $region46: #{tpu_custom_call.1} parent=27 // pred_check_branch
          %396 = sbr.rel (%p394) target = $region48
        $region47: #{tpu_custom_call.1} parent=27 // pred_region
          %398 = vsyncadd %s381, 0
          %s399 = smul.addr %s32, 8
          %s400 = scalar_lea.hbm %s2, %s399
          %s402 = sshll.u32 %s384, 4
          %s403 = int_to_ptr.vmem [resolvable:$true] %s402
          %s404 = sshll.u32 %s400, 4
          %s405 = int_to_ptr.hbm [resolvable:$true] %s404
          %407 = dma.vmem_to_hbm [thread:$0]  %s403, 128, %s405, %s381
        $region48: #{tpu_custom_call.1} parent=27 // pred_fallthru
          _
        // Predicated region
        $region49: #{tpu_custom_call.1} parent=27 // pred_check
          %p408 = pneg %p144
        $region50: #{tpu_custom_call.1} parent=27 // pred_check_branch
          %410 = sbr.rel (%p408) target = $region52
        $region51: #{tpu_custom_call.1} parent=27 // pred_region
          %412 = vsyncadd %s386, 0
          %s413 = smul.addr %s32, 8
          %s414 = scalar_lea.hbm %s3, %s413
          %s416 = sshll.u32 %s389, 4
          %s417 = int_to_ptr.vmem [resolvable:$true] %s416
          %s418 = sshll.u32 %s414, 4
          %s419 = int_to_ptr.hbm [resolvable:$true] %s418
          %421 = dma.vmem_to_hbm [thread:$0]  %s417, 128, %s419, %s386
        $region52: #{tpu_custom_call.1} parent=27 // pred_fallthru
          _
        // Predicated region
        $region53: #{tpu_custom_call.1} parent=27 // pred_check
          %p422 = pneg %p170
        $region54: #{tpu_custom_call.1} parent=27 // pred_check_branch
          %424 = sbr.rel (%p422) target = $region56
        $region55: #{tpu_custom_call.1} parent=27 // pred_region
          %426 = vsyncadd %s391, 0
          %s427 = scalar_lea.hbm %s4, %s32
          %s429 = sshll.u32 %s393, 4
          %s430 = int_to_ptr.vmem [resolvable:$true] %s429
          %s431 = sshll.u32 %s427, 4
          %s432 = int_to_ptr.hbm [resolvable:$true] %s431
          %434 = dma.vmem_to_hbm [thread:$0]  %s430, 16, %s432, %s391
        $region56: #{tpu_custom_call.1} parent=27 // pred_fallthru
          _
      $region28: #{tpu_custom_call.1} parent=5 // pred_fallthru
        _
      %p435 = scmp.le.s32.totalorder 2, %s23
      // Predicated region
      $region57: #{tpu_custom_call.1} parent=5 // pred_check
        %p436 = pneg %p435
      $region58: #{tpu_custom_call.1} parent=5 // pred_check_branch
        %438 = sbr.rel (%p436) target = $region60
      $region59: #{tpu_custom_call.1} parent=5 // pred_region
        %s439 = ssub.s32 %s23, 2
        // Predicated region
        $region61: #{tpu_custom_call.1} parent=59 // pred_check
          %p440 = pneg %p124
        $region62: #{tpu_custom_call.1} parent=59 // pred_check_branch
          %442 = sbr.rel (%p440) target = $region64
        $region63: #{tpu_custom_call.1} parent=59 // pred_region
          %s443 = sand.u32 %s109, 1
          %s444 = scalar_lea.sflag [#allocation8], %s443
          %s445 = sand.u32 %s109, 1
          %s446 = smul.addr %s445, 8
          %s447 = scalar_lea.vmem [#allocation11], %s446
          %449 = dma.done %s444, 128
        $region64: #{tpu_custom_call.1} parent=59 // pred_fallthru
          _
        // Predicated region
        $region65: #{tpu_custom_call.1} parent=59 // pred_check
          %p450 = pneg %p150
        $region66: #{tpu_custom_call.1} parent=59 // pred_check_branch
          %452 = sbr.rel (%p450) target = $region68
        $region67: #{tpu_custom_call.1} parent=59 // pred_region
          %s453 = sand.u32 %s29, 1
          %s454 = scalar_lea.sflag [#allocation13], %s453
          %s455 = sand.u32 %s135, 1
          %s456 = smul.addr %s455, 8
          %s457 = scalar_lea.vmem [#allocation12], %s456
          %459 = dma.done %s454, 128
        $region68: #{tpu_custom_call.1} parent=59 // pred_fallthru
          _
        // Predicated region
        $region69: #{tpu_custom_call.1} parent=59 // pred_check
          %p460 = pneg %p176
        $region70: #{tpu_custom_call.1} parent=59 // pred_check_branch
          %462 = sbr.rel (%p460) target = $region72
        $region71: #{tpu_custom_call.1} parent=59 // pred_region
          %s463 = sand.u32 %s29, 1
          %s464 = scalar_lea.sflag [#allocation13], %s463
          %s465 = sand.u32 %s161, 1
          %s466 = scalar_lea.vmem [#allocation14], %s465
          %468 = dma.done %s464, 16
        $region72: #{tpu_custom_call.1} parent=59 // pred_fallthru
          _
      $region60: #{tpu_custom_call.1} parent=5 // pred_fallthru
        _
    $region6: #{tpu_custom_call.1} parent=1 // loop_footer
      %s27 = sadd.s32 1, %s23
    $region7: #{tpu_custom_call.1} parent=1 // loop_footer_branch
      %22 = sbr.rel target = $region3
    $region8: #{tpu_custom_call.1} parent=1 // loop_exit
      _
    %469 = vsyncpa [#allocation7], 1
    %s470 = scalar_lea.sflag [#allocation7], 1
    %471 = vsyncpa %s470, 1
    %472 = vsyncpa [#allocation10], 1
    %s473 = scalar_lea.sflag [#allocation10], 1
    %474 = vsyncpa %s473, 1
    %475 = vsyncpa [#allocation8], 1
    %s476 = scalar_lea.sflag [#allocation8], 1
    %477 = vsyncpa %s476, 1
    %478 = vsyncpa [#allocation13], 1
    %s479 = scalar_lea.sflag [#allocation13], 1
    %480 = vsyncpa %s479, 1

</llo_original>
